<compile_context>
chip_gen: v7x
topology: tpu7x:2x2x1
jax: 0.10.0
libtpu: 0.0.40
codegen_flags: <defaults>
</compile_context>

<pallas_src>
import jax
import jax.numpy as jnp
from jax.experimental import pallas as pl
from jax.experimental.pallas import tpu as pltpu


# ---------------------------------------------------------------------------
# Kernels
# ---------------------------------------------------------------------------
def _rank_axis_kernel_row(x_ref, v_ref, o_ref):
    """x_ref: (TILE_B, D), v_ref: (1, D), o_ref: (1, TILE_B) -- lane-dense out."""
    v = v_ref[...].astype(jnp.float32)                     # (1, D)
    # v / ||v||_2 (sqrt + divide, matching torch's v / v.norm()).  Recomputed
    # every step: O(D) VPU work + one EUP sqrt per multi-us step, and unlike a
    # pl.when(program_id == 0) hoist it stays correct when the batch grid axis
    # is sharded across TensorCores.
    v_unit = v / jnp.sqrt(jnp.sum(v * v))
    x = x_ref[...].astype(jnp.float32)                     # (TILE_B, D)
    s = jnp.sum(x * v_unit, axis=1)                        # (TILE_B,) projections
    # Relayout the per-row scalars onto the lane axis (XLU) so the store is a
    # full-width (1, TILE_B) vst instead of TILE_B/8 width-1 masked stores.
    o_ref[...] = jnp.reshape(s, (1, s.shape[0]))


def _rank_axis_kernel_col(x_ref, v_ref, o_ref):
    """Fallback: o_ref is (TILE_B, 1).  Width-1 stores, but trivially lowers."""
    v = v_ref[...].astype(jnp.float32)
    v_unit = v / jnp.sqrt(jnp.sum(v * v))
    x = x_ref[...].astype(jnp.float32)
    o_ref[...] = jnp.sum(x * v_unit, axis=1, keepdims=True)


# ---------------------------------------------------------------------------
# pallas_call builder
# ---------------------------------------------------------------------------
def _build_call(*, row_out, nb, tile_b, dim):
    in_specs = [
        pl.BlockSpec((tile_b, dim), lambda i: (i, 0)),   # streamed batch tile
        pl.BlockSpec((1, dim), lambda i: (0, 0)),        # v: constant block, stays resident
    ]
    if row_out:
        kernel = _rank_axis_kernel_row
        out_shape = jax.ShapeDtypeStruct((nb, tile_b), jnp.float32)
        out_specs = pl.BlockSpec((1, tile_b), lambda i: (i, 0))
    else:
        kernel = _rank_axis_kernel_col
        out_shape = jax.ShapeDtypeStruct((nb * tile_b, 1), jnp.float32)
        out_specs = pl.BlockSpec((tile_b, 1), lambda i: (i, 0))

    return pl.pallas_call(
        kernel,
        out_shape=out_shape,
        grid_spec=pltpu.PrefetchScalarGridSpec(
            num_scalar_prefetch=0,
            grid=(nb,),
            in_specs=in_specs,
            out_specs=out_specs,
        ),
        compiler_params=pltpu.CompilerParams(
            # Lets v7x shard batch tiles across both TensorCores; neutral on 1-TC chips.
            dimension_semantics=("parallel",),
            # Explicit scoped-VMEM budget: safe on all of v5e (128 MiB phys),
            # v6e (128 MiB), v7x (64 MiB) and above v5e's 16 MiB default.
            vmem_limit_bytes=32 * 1024 * 1024,
        ),
    )


# ---------------------------------------------------------------------------
# Lane-dense-output capability probe (one-time, tiny kernel)
# ---------------------------------------------------------------------------
_LANE_DENSE_OUT = None


def _lane_dense_supported():
    """Probe whether this Mosaic build lowers the sublane->lane relayout needed
    for the (1, TILE_B) output row; otherwise use the (TILE_B, 1) fallback."""
    global _LANE_DENSE_OUT
    if _LANE_DENSE_OUT is None:
        try:
            f = _build_call(row_out=True, nb=1, tile_b=128, dim=128)
            jax.block_until_ready(
                f(jnp.zeros((128, 128), jnp.float32), jnp.ones((1, 128), jnp.float32))
            )
            _LANE_DENSE_OUT = True
        except Exception:
            _LANE_DENSE_OUT = False
    return _LANE_DENSE_OUT


# ---------------------------------------------------------------------------
# Tile sizing + forward wrapper
# ---------------------------------------------------------------------------
def _choose_tile_b(batch, dim, itemsize):
    """Pick TILE_B from a VMEM byte budget (not a row count).

    Budget ~8 MiB per x buffer (double-buffered by the pipeline -> ~16 MiB for
    x plus small v/out blocks, under the 32 MiB scoped limit requested above),
    keeping each grid step's DMA in the multi-microsecond range so the
    ~0.35 us per-step overhead stays small.  Accounts for lane padding of a
    (TILE_B, dim) block and the worst-case (TILE_B, 1) fallback output block.
    """
    lane = 128
    padded_dim = ((dim + lane - 1) // lane) * lane
    bytes_per_row = padded_dim * itemsize + lane * 4
    target_bytes = 8 * 1024 * 1024
    tile_b = max(lane, (target_bytes // bytes_per_row) // lane * lane)
    # Never use a tile bigger than the (lane-rounded) batch itself.
    tile_b = min(tile_b, ((batch + lane - 1) // lane) * lane)
    return max(lane, tile_b)


def rank_axis_forward(x, v):
    """RankAxisModel.forward: s = x @ (v / ||v||_2).  x: (..., dim) -> (...,)."""
    dim = v.shape[-1]
    lead_shape = x.shape[:-1]
    x2d = jnp.reshape(x, (-1, dim))
    b = x2d.shape[0]
    v2d = jnp.reshape(v, (1, dim)).astype(jnp.float32)

    tile_b = _choose_tile_b(b, dim, jnp.dtype(x.dtype).itemsize)
    b_pad = ((b + tile_b - 1) // tile_b) * tile_b
    if b_pad != b:
        # Ragged last tile: zero-pad rows and slice the result.  Batches that
        # are already a multiple of TILE_B skip this copy entirely.
        x2d = jnp.pad(x2d, ((0, b_pad - b), (0, 0)))
    nb = b_pad // tile_b

    call = _build_call(row_out=_lane_dense_supported(), nb=nb, tile_b=tile_b, dim=dim)
    out = call(x2d, v2d)                       # (nb, tile_b) or (b_pad, 1), f32
    flat = jnp.reshape(out, (b_pad,))[:b]
    return jnp.reshape(flat, lead_shape)


# ---------------------------------------------------------------------------
# Demo / correctness check
# ---------------------------------------------------------------------------
if __name__ == "__main__":
    key = jax.random.PRNGKey(0)
    k_x, k_v = jax.random.split(key)

    dim = 32
    lead = (2, 4)                                  # x: (2, 4, 32) -> s: (2, 4)

    v = jax.random.normal(k_v, (dim,), dtype=jnp.float32)
    x = jax.random.normal(k_x, lead + (dim,), dtype=jnp.float32)

    s = rank_axis_forward(x, v)
    s = jax.block_until_ready(s)

    # Pure-JAX reference of the PyTorch forward.
    v_unit = v / jnp.linalg.norm(v)
    s_ref = x @ v_unit
    assert s.shape == lead
    assert jnp.allclose(s, s_ref, atol=1e-5, rtol=1e-5)

    print("KERNEL_OK")
</pallas_src>

<mosaic_0001>
module attributes {stable_mosaic.version = 11 : i64} {
  func.func @_rank_axis_kernel_row(%arg0: i32, %arg1: memref<128x128xf32, #tpu.memory_space<vmem>>, %arg2: memref<1x128xf32, #tpu.memory_space<vmem>>, %arg3: memref<1x128xf32, #tpu.memory_space<vmem>>) attributes {dimension_semantics = [#tpu.dimension_semantics<parallel>], iteration_bounds = array<i64: 1>, scalar_prefetch = 0 : i64, scratch_operands = 0 : i64, tpu.core_type = #tpu.core_type<tc>, window_params = [{transform_indices = @transform_0, window_bounds = array<i64: 128, 128>}, {pipeline_mode = #tpu.pipeline_mode<synchronous>, transform_indices = @transform_1, window_bounds = array<i64: 1, 128>}, {transform_indices = @transform_2, window_bounds = array<i64: 1, 128>}]} {
    %c0 = arith.constant 0 : index
    %c0_0 = arith.constant 0 : index
    %0 = vector.load %arg2[%c0, %c0_0] : memref<1x128xf32, #tpu.memory_space<vmem>>, vector<1x128xf32>
    %1 = arith.mulf %0, %0 : vector<1x128xf32>
    %2 = vector.shape_cast %1 : vector<1x128xf32> to vector<1x1x128xf32>
    %cst = arith.constant dense<0.000000e+00> : vector<1xf32>
    %3 = vector.multi_reduction <add>, %2, %cst [1, 2] : vector<1x1x128xf32> to vector<1xf32>
    %4 = vector.shape_cast %3 : vector<1xf32> to vector<1x1x1xf32>
    %5 = vector.extract %4[0, 0, 0] : f32 from vector<1x1x1xf32>
    %6 = math.sqrt %5 : f32
    %7 = vector.broadcast %6 : f32 to vector<1x128xf32>
    %8 = arith.divf %0, %7 : vector<1x128xf32>
    %c0_1 = arith.constant 0 : index
    %c0_2 = arith.constant 0 : index
    %9 = vector.load %arg1[%c0_1, %c0_2] : memref<128x128xf32, #tpu.memory_space<vmem>>, vector<128x128xf32>
    %10 = vector.broadcast %8 : vector<1x128xf32> to vector<128x128xf32>
    %11 = arith.mulf %9, %10 : vector<128x128xf32>
    %cst_3 = arith.constant dense<0.000000e+00> : vector<128xf32>
    %12 = vector.multi_reduction <add>, %11, %cst_3 [1] : vector<128x128xf32> to vector<128xf32>
    %13 = vector.shape_cast %12 : vector<128xf32> to vector<1x128xf32>
    %c0_4 = arith.constant 0 : index
    %c0_5 = arith.constant 0 : index
    %14 = vector.load %arg3[%c0_4, %c0_5] : memref<1x128xf32, #tpu.memory_space<vmem>>, vector<1x128xf32>
    tpu.vector_store %arg3[%c0_4, %c0_5], %13 {strides = array<i32>} : memref<1x128xf32, #tpu.memory_space<vmem>>, vector<1x128xf32>,
    return
  }
  func.func @transform_0(%arg0: i32) -> (i32, i32) {
    %c0_i32 = arith.constant 0 : i32
    %c0_i32_0 = arith.constant 0 : i32
    return %arg0, %c0_i32 : i32, i32
  }
  func.func @transform_1(%arg0: i32) -> (i32, i32) {
    %c0_i32 = arith.constant 0 : i32
    %c0_i32_0 = arith.constant 0 : i32
    %c0_i32_1 = arith.constant 0 : i32
    return %c0_i32, %c0_i32_0 : i32, i32
  }
  func.func @transform_2(%arg0: i32) -> (i32, i32) {
    %c0_i32 = arith.constant 0 : i32
    %c0_i32_0 = arith.constant 0 : i32
    return %arg0, %c0_i32 : i32, i32
  }
}

module attributes {stable_mosaic.version = 11 : i64} {
  func.func @_rank_axis_kernel_col(%arg0: i32, %arg1: memref<128x32xf32, #tpu.memory_space<vmem>>, %arg2: memref<1x32xf32, #tpu.memory_space<vmem>>, %arg3: memref<128x1xf32, #tpu.memory_space<vmem>>) attributes {dimension_semantics = [#tpu.dimension_semantics<parallel>], iteration_bounds = array<i64: 1>, scalar_prefetch = 0 : i64, scratch_operands = 0 : i64, tpu.core_type = #tpu.core_type<tc>, window_params = [{transform_indices = @transform_0, window_bounds = array<i64: 128, 32>}, {pipeline_mode = #tpu.pipeline_mode<synchronous>, transform_indices = @transform_1, window_bounds = array<i64: 1, 32>}, {transform_indices = @transform_2, window_bounds = array<i64: 128, 1>}]} {
    %c0 = arith.constant 0 : index
    %c0_0 = arith.constant 0 : index
    %0 = vector.load %arg2[%c0, %c0_0] : memref<1x32xf32, #tpu.memory_space<vmem>>, vector<1x32xf32>
    %1 = arith.mulf %0, %0 : vector<1x32xf32>
    %2 = vector.shape_cast %1 : vector<1x32xf32> to vector<1x1x32xf32>
    %cst = arith.constant dense<0.000000e+00> : vector<1xf32>
    %3 = vector.multi_reduction <add>, %2, %cst [1, 2] : vector<1x1x32xf32> to vector<1xf32>
    %4 = vector.shape_cast %3 : vector<1xf32> to vector<1x1x1xf32>
    %5 = vector.extract %4[0, 0, 0] : f32 from vector<1x1x1xf32>
    %6 = math.sqrt %5 : f32
    %7 = vector.broadcast %6 : f32 to vector<1x32xf32>
    %8 = arith.divf %0, %7 : vector<1x32xf32>
    %c0_1 = arith.constant 0 : index
    %c0_2 = arith.constant 0 : index
    %9 = vector.load %arg1[%c0_1, %c0_2] : memref<128x32xf32, #tpu.memory_space<vmem>>, vector<128x32xf32>
    %10 = vector.broadcast %8 : vector<1x32xf32> to vector<128x32xf32>
    %11 = arith.mulf %9, %10 : vector<128x32xf32>
    %cst_3 = arith.constant dense<0.000000e+00> : vector<128xf32>
    %12 = vector.multi_reduction <add>, %11, %cst_3 [1] : vector<128x32xf32> to vector<128xf32>
    %13 = vector.shape_cast %12 : vector<128xf32> to vector<128x1xf32>
    %c0_4 = arith.constant 0 : index
    %c0_5 = arith.constant 0 : index
    %14 = vector.load %arg3[%c0_4, %c0_5] : memref<128x1xf32, #tpu.memory_space<vmem>>, vector<128x1xf32>
    tpu.vector_store %arg3[%c0_4, %c0_5], %13 {strides = array<i32>} : memref<128x1xf32, #tpu.memory_space<vmem>>, vector<128x1xf32>,
    return
  }
  func.func @transform_0(%arg0: i32) -> (i32, i32) {
    %c0_i32 = arith.constant 0 : i32
    %c0_i32_0 = arith.constant 0 : i32
    return %arg0, %c0_i32 : i32, i32
  }
  func.func @transform_1(%arg0: i32) -> (i32, i32) {
    %c0_i32 = arith.constant 0 : i32
    %c0_i32_0 = arith.constant 0 : i32
    %c0_i32_1 = arith.constant 0 : i32
    return %c0_i32, %c0_i32_0 : i32, i32
  }
  func.func @transform_2(%arg0: i32) -> (i32, i32) {
    %c0_i32 = arith.constant 0 : i32
    %c0_i32_0 = arith.constant 0 : i32
    return %arg0, %c0_i32 : i32, i32
  }
}

</mosaic_0001>

<llo_original>
// kernel: tpu_custom_call.1
$region0: #{tpu_custom_call.1}
  #allocation0 [shape = 'u32[]', space=smem, size = 0x4, offset = 0x4, fixed_abs, tag = 'smem constant byte address 0x4 - core index']
  #allocation1 [shape = 'u32[144,128]{1,0:T(1,128)}', space=vmem, size = 0x12000, scoped, tag = 'internal scratch']
  %s0 = inlined_call_operand.hbm [shape: f32[128,128], index: 0, kind: input, shape index: {}]
  %s1 = inlined_call_operand.vmem [shape: f32[1,128], index: 1, kind: input, shape index: {}]
  %s2 = inlined_call_operand.hbm [shape: f32[1,128], index: 2, kind: output, shape index: {}]
  %s3 = sld [smem:[#allocation0]]
  $region22: #{tpu_custom_call.1} parent=0
    _
  %s5 = ssub.s32 1, %s3
  %s6 = scalar_select 0, %s5, %s3
  $region1: #{tpu_custom_call.1} parent=0
    #allocation2 [shape = 'u8[65536]{0}', space=vmem, size = 0x10000, scoped, tag = 'input window, operand 0, single buffered']
    #allocation3 [shape = 's32[1]{0}', space=sflag, size = 0x4, scoped, tag = 'scoped memory for tpu_custom_call.1']
    #allocation4 [shape = 's32[1]{0}', space=sflag, size = 0x4, scoped, tag = 'scoped memory for tpu_custom_call.1']
    #allocation5 [shape = 'u8[512]{0}', space=vmem, size = 0x400, scoped, tag = 'output window, operand 0, single buffered']
    %7 = vsyncpa [#allocation3], 0
    %8 = vsyncpa [#allocation4], 0
    // Predicated region
    $region2: #{tpu_custom_call.1} parent=1 // pred_check
      _
    $region3: #{tpu_custom_call.1} parent=1 // pred_check_branch
      %10 = sbr.rel (0) target = $region5
    $region4: #{tpu_custom_call.1} parent=1 // pred_region
      %s12 = ssub.s32 2048, 2048
      %13 = vsyncadd [#allocation3], %s12
      %s14 = sshll.u32 [#allocation2], 4
      %s15 = int_to_ptr.vmem [resolvable:$true] %s14
      %20 = dma.hbm_to_vmem [thread:$0]  %s0, 2048, %s15, [#allocation3], 128, 128, 8
    $region5: #{tpu_custom_call.1} parent=1 // pred_fallthru
      _
    // Predicated region
    $region6: #{tpu_custom_call.1} parent=1 // pred_check
      _
    $region7: #{tpu_custom_call.1} parent=1 // pred_check_branch
      %22 = sbr.rel (0) target = $region9
    $region8: #{tpu_custom_call.1} parent=1 // pred_region
      _
    $region9: #{tpu_custom_call.1} parent=1 // pred_fallthru
      _
    // Predicated region
    $region10: #{tpu_custom_call.1} parent=1 // pred_check
      _
    $region11: #{tpu_custom_call.1} parent=1 // pred_check_branch
      %24 = sbr.rel (0) target = $region13
    $region12: #{tpu_custom_call.1} parent=1 // pred_region
      %25 = dma.done [#allocation3], 2048
    $region13: #{tpu_custom_call.1} parent=1 // pred_fallthru
      _
    %v26 = vld [vmem:[%s1] sm:$0x1]
    %v27 = vmul.f32 %v26, %v26
    %vm28 = vcmask 1040384
    %v29 = vsel %vm28, %v27, 0.0
    %30 = vadd.xlane.f32.xlu0 %v29
    %v31 = vpop.xlane.xlu0 %30
    %v32 = vrot.slane %v31, 4
    %v33 = vadd.f32 %v31, %v32
    %v34 = vrot.slane %v33, 2
    %v35 = vadd.f32 %v33, %v34
    %v36 = vrot.slane %v35, 1
    %v37 = vadd.f32 %v35, %v36
    %s38 = vtos %v37
    %v39 = vstv %s38
    %v40 = vrsqrt.pop %v39
    %v41 = vmul.f32 %v39, %v40
    %vm42 = vcmp.eq.f32.partialorder %v39, inf
    %v43 = vsel %vm42, %v39, %v41
    %vm44 = vcmp.eq.f32.partialorder %v39, 0.0
    %v45 = vand.u32 %v39, 2147483648
    %v46 = vsel %vm44, %v45, %v43
    %s47 = vtos %v46
    %v48 = vstv %s47
    %v49 = vrcp.pop %v48
    %v50 = vmul.f32 %v26, %v49
    %v51 = vld [vmem:[#allocation2] sm:$0xff]
    %v52 = vld [vmem:[#allocation2 + $0x8] sm:$0xff]
    %v53 = vld [vmem:[#allocation2 + $0x10] sm:$0xff]
    %v54 = vld [vmem:[#allocation2 + $0x18] sm:$0xff]
    %v55 = vld [vmem:[#allocation2 + $0x20] sm:$0xff]
    %v56 = vld [vmem:[#allocation2 + $0x28] sm:$0xff]
    %v57 = vld [vmem:[#allocation2 + $0x30] sm:$0xff]
    %v58 = vld [vmem:[#allocation2 + $0x38] sm:$0xff]
    %v59 = vld [vmem:[#allocation2 + $0x40] sm:$0xff]
    %v60 = vld [vmem:[#allocation2 + $0x48] sm:$0xff]
    %v61 = vld [vmem:[#allocation2 + $0x50] sm:$0xff]
    %v62 = vld [vmem:[#allocation2 + $0x58] sm:$0xff]
    %v63 = vld [vmem:[#allocation2 + $0x60] sm:$0xff]
    %v64 = vld [vmem:[#allocation2 + $0x68] sm:$0xff]
    %v65 = vld [vmem:[#allocation2 + $0x70] sm:$0xff]
    %v66 = vld [vmem:[#allocation2 + $0x78] sm:$0xff]
    %v68 = vlaneseq
    %v69 = vshrl.u32 %v68, 7
    %v70 = vsub.s32 0, %v69
    %v71 = vrot.slane %v50, %v70
    %v73 = vmul.f32 %v51, %v71
    %v74 = vmul.f32 %v52, %v71
    %v75 = vmul.f32 %v53, %v71
    %v76 = vmul.f32 %v54, %v71
    %v77 = vmul.f32 %v55, %v71
    %v78 = vmul.f32 %v56, %v71
    %v79 = vmul.f32 %v57, %v71
    %v80 = vmul.f32 %v58, %v71
    %v81 = vmul.f32 %v59, %v71
    %v82 = vmul.f32 %v60, %v71
    %v83 = vmul.f32 %v61, %v71
    %v84 = vmul.f32 %v62, %v71
    %v85 = vmul.f32 %v63, %v71
    %v86 = vmul.f32 %v64, %v71
    %v87 = vmul.f32 %v65, %v71
    %v88 = vmul.f32 %v66, %v71
    %89 = vadd.xlane.f32.xlu0 %v73
    %v90 = vpop.xlane.xlu0 %89
    %91 = vadd.xlane.f32.xlu0 %v74
    %v92 = vpop.xlane.xlu0 %91
    %93 = vadd.xlane.f32.xlu0 %v75
    %v94 = vpop.xlane.xlu0 %93
    %95 = vadd.xlane.f32.xlu0 %v76
    %v96 = vpop.xlane.xlu0 %95
    %97 = vadd.xlane.f32.xlu0 %v77
    %v98 = vpop.xlane.xlu0 %97
    %99 = vadd.xlane.f32.xlu0 %v78
    %v100 = vpop.xlane.xlu0 %99
    %101 = vadd.xlane.f32.xlu0 %v79
    %v102 = vpop.xlane.xlu0 %101
    %103 = vadd.xlane.f32.xlu0 %v80
    %v104 = vpop.xlane.xlu0 %103
    %105 = vadd.xlane.f32.xlu0 %v81
    %v106 = vpop.xlane.xlu0 %105
    %107 = vadd.xlane.f32.xlu0 %v82
    %v108 = vpop.xlane.xlu0 %107
    %109 = vadd.xlane.f32.xlu0 %v83
    %v110 = vpop.xlane.xlu0 %109
    %111 = vadd.xlane.f32.xlu0 %v84
    %v112 = vpop.xlane.xlu0 %111
    %113 = vadd.xlane.f32.xlu0 %v85
    %v114 = vpop.xlane.xlu0 %113
    %115 = vadd.xlane.f32.xlu0 %v86
    %v116 = vpop.xlane.xlu0 %115
    %117 = vadd.xlane.f32.xlu0 %v87
    %v118 = vpop.xlane.xlu0 %117
    %119 = vadd.xlane.f32.xlu0 %v88
    %v120 = vpop.xlane.xlu0 %119
    %v137 = vlaneseq
    %v138 = vand.u32 %v137, 127
    %v139 = vlaneseq
    %v140 = vshrl.u32 %v139, 7
    %v141 = vsub.s32 %v138, %v140
    %v142 = vrot.slane %v90, %v141
    %v143 = vadd.s32 %v138, 4294967288
    %v144 = vlaneseq
    %v145 = vshrl.u32 %v144, 7
    %v146 = vsub.s32 %v143, %v145
    %v147 = vrot.slane %v92, %v146
    %vm148 = vcmask 130112
    %v149 = vsel %vm148, %v147, %v142
    %v150 = vadd.s32 %v138, 4294967280
    %v151 = vlaneseq
    %v152 = vshrl.u32 %v151, 7
    %v153 = vsub.s32 %v150, %v152
    %v154 = vrot.slane %v94, %v153
    %vm155 = vcmask 195712
    %v156 = vsel %vm155, %v154, %v149
    %v157 = vadd.s32 %v138, 4294967272
    %v158 = vlaneseq
    %v159 = vshrl.u32 %v158, 7
    %v160 = vsub.s32 %v157, %v159
    %v161 = vrot.slane %v96, %v160
    %vm162 = vcmask 261312
    %v163 = vsel %vm162, %v161, %v156
    %v164 = vadd.s32 %v138, 4294967264
    %v165 = vlaneseq
    %v166 = vshrl.u32 %v165, 7
    %v167 = vsub.s32 %v164, %v166
    %v168 = vrot.slane %v98, %v167
    %vm169 = vcmask 326912
    %v170 = vsel %vm169, %v168, %v163
    %v171 = vadd.s32 %v138, 4294967256
    %v172 = vlaneseq
    %v173 = vshrl.u32 %v172, 7
    %v174 = vsub.s32 %v171, %v173
    %v175 = vrot.slane %v100, %v174
    %vm176 = vcmask 392512
    %v177 = vsel %vm176, %v175, %v170
    %v178 = vadd.s32 %v138, 4294967248
    %v179 = vlaneseq
    %v180 = vshrl.u32 %v179, 7
    %v181 = vsub.s32 %v178, %v180
    %v182 = vrot.slane %v102, %v181
    %vm183 = vcmask 458112
    %v184 = vsel %vm183, %v182, %v177
    %v185 = vadd.s32 %v138, 4294967240
    %v186 = vlaneseq
    %v187 = vshrl.u32 %v186, 7
    %v188 = vsub.s32 %v185, %v187
    %v189 = vrot.slane %v104, %v188
    %vm190 = vcmask 523712
    %v191 = vsel %vm190, %v189, %v184
    %v192 = vadd.s32 %v138, 4294967232
    %v193 = vlaneseq
    %v194 = vshrl.u32 %v193, 7
    %v195 = vsub.s32 %v192, %v194
    %v196 = vrot.slane %v106, %v195
    %vm197 = vcmask 589312
    %v198 = vsel %vm197, %v196, %v191
    %v199 = vadd.s32 %v138, 4294967224
    %v200 = vlaneseq
    %v201 = vshrl.u32 %v200, 7
    %v202 = vsub.s32 %v199, %v201
    %v203 = vrot.slane %v108, %v202
    %vm204 = vcmask 654912
    %v205 = vsel %vm204, %v203, %v198
    %v206 = vadd.s32 %v138, 4294967216
    %v207 = vlaneseq
    %v208 = vshrl.u32 %v207, 7
    %v209 = vsub.s32 %v206, %v208
    %v210 = vrot.slane %v110, %v209
    %vm211 = vcmask 720512
    %v212 = vsel %vm211, %v210, %v205
    %v213 = vadd.s32 %v138, 4294967208
    %v214 = vlaneseq
    %v215 = vshrl.u32 %v214, 7
    %v216 = vsub.s32 %v213, %v215
    %v217 = vrot.slane %v112, %v216
    %vm218 = vcmask 786112
    %v219 = vsel %vm218, %v217, %v212
    %v220 = vadd.s32 %v138, 4294967200
    %v221 = vlaneseq
    %v222 = vshrl.u32 %v221, 7
    %v223 = vsub.s32 %v220, %v222
    %v224 = vrot.slane %v114, %v223
    %vm225 = vcmask 851712
    %v226 = vsel %vm225, %v224, %v219
    %v227 = vadd.s32 %v138, 4294967192
    %v228 = vlaneseq
    %v229 = vshrl.u32 %v228, 7
    %v230 = vsub.s32 %v227, %v229
    %v231 = vrot.slane %v116, %v230
    %vm232 = vcmask 917312
    %v233 = vsel %vm232, %v231, %v226
    %v234 = vadd.s32 %v138, 4294967184
    %v235 = vlaneseq
    %v236 = vshrl.u32 %v235, 7
    %v237 = vsub.s32 %v234, %v236
    %v238 = vrot.slane %v118, %v237
    %vm239 = vcmask 982912
    %v240 = vsel %vm239, %v238, %v233
    %v241 = vadd.s32 %v138, 4294967176
    %v242 = vlaneseq
    %v243 = vshrl.u32 %v242, 7
    %v244 = vsub.s32 %v241, %v243
    %v245 = vrot.slane %v120, %v244
    %vm246 = vcmask 1048512
    %v247 = vsel %vm246, %v245, %v240
    %249 = vst [vmem:[#allocation5] sm:$0x1] %v247
    // Predicated region
    $region14: #{tpu_custom_call.1} parent=1 // pred_check
      _
    $region15: #{tpu_custom_call.1} parent=1 // pred_check_branch
      %251 = sbr.rel (0) target = $region17
    $region16: #{tpu_custom_call.1} parent=1 // pred_region
      %s253 = ssub.s32 16, 16
      %254 = vsyncadd [#allocation4], %s253
      %s256 = sshll.u32 [#allocation5], 4
      %s257 = int_to_ptr.vmem [resolvable:$true] %s256
      %259 = dma.vmem_to_hbm [thread:$0]  %s257, 16, %s2, [#allocation4]
    $region17: #{tpu_custom_call.1} parent=1 // pred_fallthru
      _
    // Predicated region
    $region18: #{tpu_custom_call.1} parent=1 // pred_check
      _
    $region19: #{tpu_custom_call.1} parent=1 // pred_check_branch
      %261 = sbr.rel (0) target = $region21
    $region20: #{tpu_custom_call.1} parent=1 // pred_region
      %262 = dma.done [#allocation4], 16
    $region21: #{tpu_custom_call.1} parent=1 // pred_fallthru
      _
    %263 = vsyncpa [#allocation3], 1
    %264 = vsyncpa [#allocation4], 1

// kernel: tpu_custom_call.1
$region0: #{tpu_custom_call.1}
  #allocation0 [shape = 'u32[]', space=smem, size = 0x4, offset = 0x4, fixed_abs, tag = 'smem constant byte address 0x4 - core index']
  #allocation1 [shape = 'u32[144,128]{1,0:T(1,128)}', space=vmem, size = 0x12000, scoped, tag = 'internal scratch']
  %s0 = inlined_call_operand.vmem [shape: f32[128,32], index: 0, kind: input, shape index: {}]
  %s1 = inlined_call_operand.vmem [shape: f32[1,32], index: 1, kind: input, shape index: {}]
  %s2 = inlined_call_operand.vmem [shape: f32[128,1], index: 2, kind: output, shape index: {}]
  %s3 = sld [smem:[#allocation0]]
  $region18: #{tpu_custom_call.1} parent=0
    _
  %s5 = ssub.s32 1, %s3
  %s6 = scalar_select 0, %s5, %s3
  // Predicated region
  $region2: #{tpu_custom_call.1} parent=0 // pred_check
    _
  $region3: #{tpu_custom_call.1} parent=0 // pred_check_branch
    %8 = sbr.rel (0) target = $region5
  $region4: #{tpu_custom_call.1} parent=0 // pred_region
    _
  $region5: #{tpu_custom_call.1} parent=0 // pred_fallthru
    _
  // Predicated region
  $region6: #{tpu_custom_call.1} parent=0 // pred_check
    _
  $region7: #{tpu_custom_call.1} parent=0 // pred_check_branch
    %10 = sbr.rel (0) target = $region9
  $region8: #{tpu_custom_call.1} parent=0 // pred_region
    _
  $region9: #{tpu_custom_call.1} parent=0 // pred_fallthru
    _
  %v11 = vld [vmem:[%s1] sm:$0x1]
  %v12 = vmul.f32 %v11, %v11
  %vm13 = vcmask 253952
  %v14 = vsel %vm13, %v12, 0.0
  %15 = vadd.xlane.f32.xlu0 %v14
  %v16 = vpop.xlane.xlu0 %15
  %v17 = vrot.slane %v16, 4
  %v18 = vadd.f32 %v16, %v17
  %v19 = vrot.slane %v18, 2
  %v20 = vadd.f32 %v18, %v19
  %v21 = vrot.slane %v20, 1
  %v22 = vadd.f32 %v20, %v21
  %s23 = vtos %v22
  %v24 = vstv %s23
  %v25 = vrsqrt.pop %v24
  %v26 = vmul.f32 %v24, %v25
  %vm27 = vcmp.eq.f32.partialorder %v24, inf
  %v28 = vsel %vm27, %v24, %v26
  %vm29 = vcmp.eq.f32.partialorder %v24, 0.0
  %v30 = vand.u32 %v24, 2147483648
  %v31 = vsel %vm29, %v30, %v28
  %s32 = vtos %v31
  %v33 = vstv %s32
  %v34 = vrcp.pop %v33
  %v35 = vmul.f32 %v11, %v34
  %v36 = vld [vmem:[%s0] sm:$0xff]
  %v37 = vld [vmem:[%s0 + $0x8] sm:$0xff]
  %v38 = vld [vmem:[%s0 + $0x10] sm:$0xff]
  %v39 = vld [vmem:[%s0 + $0x18] sm:$0xff]
  %v40 = vld [vmem:[%s0 + $0x20] sm:$0xff]
  %v41 = vld [vmem:[%s0 + $0x28] sm:$0xff]
  %v42 = vld [vmem:[%s0 + $0x30] sm:$0xff]
  %v43 = vld [vmem:[%s0 + $0x38] sm:$0xff]
  %v44 = vld [vmem:[%s0 + $0x40] sm:$0xff]
  %v45 = vld [vmem:[%s0 + $0x48] sm:$0xff]
  %v46 = vld [vmem:[%s0 + $0x50] sm:$0xff]
  %v47 = vld [vmem:[%s0 + $0x58] sm:$0xff]
  %v48 = vld [vmem:[%s0 + $0x60] sm:$0xff]
  %v49 = vld [vmem:[%s0 + $0x68] sm:$0xff]
  %v50 = vld [vmem:[%s0 + $0x70] sm:$0xff]
  %v51 = vld [vmem:[%s0 + $0x78] sm:$0xff]
  %v53 = vlaneseq
  %v54 = vshrl.u32 %v53, 7
  %v55 = vsub.s32 0, %v54
  %v56 = vrot.slane %v35, %v55
  %v58 = vmul.f32 %v36, %v56
  %v59 = vmul.f32 %v37, %v56
  %v60 = vmul.f32 %v38, %v56
  %v61 = vmul.f32 %v39, %v56
  %v62 = vmul.f32 %v40, %v56
  %v63 = vmul.f32 %v41, %v56
  %v64 = vmul.f32 %v42, %v56
  %v65 = vmul.f32 %v43, %v56
  %v66 = vmul.f32 %v44, %v56
  %v67 = vmul.f32 %v45, %v56
  %v68 = vmul.f32 %v46, %v56
  %v69 = vmul.f32 %v47, %v56
  %v70 = vmul.f32 %v48, %v56
  %v71 = vmul.f32 %v49, %v56
  %v72 = vmul.f32 %v50, %v56
  %v73 = vmul.f32 %v51, %v56
  %vm74 = vcmask 261120
  %v75 = vsel %vm74, %v58, 0.0
  %76 = vadd.xlane.f32.xlu0 %v75
  %v77 = vpop.xlane.xlu0 %76
  %v78 = vsel %vm74, %v59, 0.0
  %79 = vadd.xlane.f32.xlu0 %v78
  %v80 = vpop.xlane.xlu0 %79
  %v81 = vsel %vm74, %v60, 0.0
  %82 = vadd.xlane.f32.xlu0 %v81
  %v83 = vpop.xlane.xlu0 %82
  %v84 = vsel %vm74, %v61, 0.0
  %85 = vadd.xlane.f32.xlu0 %v84
  %v86 = vpop.xlane.xlu0 %85
  %v87 = vsel %vm74, %v62, 0.0
  %88 = vadd.xlane.f32.xlu0 %v87
  %v89 = vpop.xlane.xlu0 %88
  %v90 = vsel %vm74, %v63, 0.0
  %91 = vadd.xlane.f32.xlu0 %v90
  %v92 = vpop.xlane.xlu0 %91
  %v93 = vsel %vm74, %v64, 0.0
  %94 = vadd.xlane.f32.xlu0 %v93
  %v95 = vpop.xlane.xlu0 %94
  %v96 = vsel %vm74, %v65, 0.0
  %97 = vadd.xlane.f32.xlu0 %v96
  %v98 = vpop.xlane.xlu0 %97
  %v99 = vsel %vm74, %v66, 0.0
  %100 = vadd.xlane.f32.xlu0 %v99
  %v101 = vpop.xlane.xlu0 %100
  %v102 = vsel %vm74, %v67, 0.0
  %103 = vadd.xlane.f32.xlu0 %v102
  %v104 = vpop.xlane.xlu0 %103
  %v105 = vsel %vm74, %v68, 0.0
  %106 = vadd.xlane.f32.xlu0 %v105
  %v107 = vpop.xlane.xlu0 %106
  %v108 = vsel %vm74, %v69, 0.0
  %109 = vadd.xlane.f32.xlu0 %v108
  %v110 = vpop.xlane.xlu0 %109
  %v111 = vsel %vm74, %v70, 0.0
  %112 = vadd.xlane.f32.xlu0 %v111
  %v113 = vpop.xlane.xlu0 %112
  %v114 = vsel %vm74, %v71, 0.0
  %115 = vadd.xlane.f32.xlu0 %v114
  %v116 = vpop.xlane.xlu0 %115
  %v117 = vsel %vm74, %v72, 0.0
  %118 = vadd.xlane.f32.xlu0 %v117
  %v119 = vpop.xlane.xlu0 %118
  %v120 = vsel %vm74, %v73, 0.0
  %121 = vadd.xlane.f32.xlu0 %v120
  %v122 = vpop.xlane.xlu0 %121
  %vm123 = vcmask 7168
  %124 = vst.msk [vmem:[%s2] sm:$0xff] %vm123, %v77
  %125 = vst.msk [vmem:[%s2 + $0x8] sm:$0xff] %vm123, %v80
  %126 = vst.msk [vmem:[%s2 + $0x10] sm:$0xff] %vm123, %v83
  %127 = vst.msk [vmem:[%s2 + $0x18] sm:$0xff] %vm123, %v86
  %128 = vst.msk [vmem:[%s2 + $0x20] sm:$0xff] %vm123, %v89
  %129 = vst.msk [vmem:[%s2 + $0x28] sm:$0xff] %vm123, %v92
  %130 = vst.msk [vmem:[%s2 + $0x30] sm:$0xff] %vm123, %v95
  %131 = vst.msk [vmem:[%s2 + $0x38] sm:$0xff] %vm123, %v98
  %132 = vst.msk [vmem:[%s2 + $0x40] sm:$0xff] %vm123, %v101
  %133 = vst.msk [vmem:[%s2 + $0x48] sm:$0xff] %vm123, %v104
  %134 = vst.msk [vmem:[%s2 + $0x50] sm:$0xff] %vm123, %v107
  %135 = vst.msk [vmem:[%s2 + $0x58] sm:$0xff] %vm123, %v110
  %136 = vst.msk [vmem:[%s2 + $0x60] sm:$0xff] %vm123, %v113
  %137 = vst.msk [vmem:[%s2 + $0x68] sm:$0xff] %vm123, %v116
  %138 = vst.msk [vmem:[%s2 + $0x70] sm:$0xff] %vm123, %v119
  %139 = vst.msk [vmem:[%s2 + $0x78] sm:$0xff] %vm123, %v122
  // Predicated region
  $region10: #{tpu_custom_call.1} parent=0 // pred_check
    _
  $region11: #{tpu_custom_call.1} parent=0 // pred_check_branch
    %141 = sbr.rel (0) target = $region13
  $region12: #{tpu_custom_call.1} parent=0 // pred_region
    _
  $region13: #{tpu_custom_call.1} parent=0 // pred_fallthru
    _
  // Predicated region
  $region14: #{tpu_custom_call.1} parent=0 // pred_check
    _
  $region15: #{tpu_custom_call.1} parent=0 // pred_check_branch
    %143 = sbr.rel (0) target = $region17
  $region16: #{tpu_custom_call.1} parent=0 // pred_region
    _
  $region17: #{tpu_custom_call.1} parent=0 // pred_fallthru
    _

</llo_original>
